<compile_context>
chip_gen: v7x
topology: tpu7x:2x2x1
jax: 0.10.0
libtpu: 0.0.40
codegen_flags: <defaults>
</compile_context>

<pallas_src>
import jax
import jax.numpy as jnp
from jax.experimental import pallas as pl
from jax.experimental.pallas import tpu as pltpu


def _round_up(x, m):
    return ((x + m - 1) // m) * m


# ---------------------------------------------------------------------------
# Kernel
# ---------------------------------------------------------------------------
def critic_kernel(s_ref, a_ref, w1s_ref, w1a_ref, b1_ref,
                  w2_ref, b2_ref, w3_ref, b3_ref, o_ref):
    # fc1: concat(state, action) @ W1 == state @ W1_s + action @ W1_a.
    # bf16 MXU operands, f32 accumulation; bias/ReLU in f32 (v5e has no bf16 VPU).
    h1 = jnp.dot(s_ref[...].astype(jnp.bfloat16), w1s_ref[...],
                 preferred_element_type=jnp.float32)
    h1 = h1 + jnp.dot(a_ref[...].astype(jnp.bfloat16), w1a_ref[...],
                      preferred_element_type=jnp.float32)
    h1 = jnp.maximum(h1 + b1_ref[...], 0.0)

    # fc2
    h2 = jnp.dot(h1.astype(jnp.bfloat16), w2_ref[...],
                 preferred_element_type=jnp.float32)
    h2 = jnp.maximum(h2 + b2_ref[...], 0.0)

    # fc3 (H -> 1): VPU multiply + XLU lane-reduction instead of an N=1 MXU
    # pass.  Padded lanes of w3 are zero so they contribute nothing.
    q = jnp.sum(h2 * w3_ref[...], axis=-1, keepdims=True) + b3_ref[0]
    o_ref[...] = q.astype(o_ref.dtype)


# ---------------------------------------------------------------------------
# Parameter construction / preparation
# ---------------------------------------------------------------------------
def init_critic_params(key, state_dim, action_dim, hidden_size):
    """Deterministic init mimicking nn.Linear (uniform +/- 1/sqrt(fan_in)).

    Weights are stored (in_features, out_features), biases (1, out_features).
    """
    def linear(key, fan_in, fan_out):
        kw, kb = jax.random.split(key)
        bound = 1.0 / jnp.sqrt(jnp.float32(fan_in))
        w = jax.random.uniform(kw, (fan_in, fan_out), jnp.float32, -bound, bound)
        b = jax.random.uniform(kb, (1, fan_out), jnp.float32, -bound, bound)
        return w, b

    k1, k2, k3 = jax.random.split(key, 3)
    in_dim = state_dim + action_dim
    w1, b1 = linear(k1, in_dim, hidden_size)
    w2, b2 = linear(k2, hidden_size, hidden_size)
    w3, b3 = linear(k3, hidden_size, 1)
    return (w1, b1, w2, b2, w3, b3)


def prepare_critic_params(params, state_dim):
    """One-time transform of the logical params into kernel-friendly layout:
       - split W1 into state/action halves (kills the concat),
       - zero-pad the hidden dim up to 128 lanes,
       - store MXU weights in bf16, keep biases / w3-row in f32,
       - flatten b3 to a scalar for SMEM."""
    w1, b1, w2, b2, w3, b3 = params
    hidden = w1.shape[1]
    hp = _round_up(hidden, 128)

    def pad_cols(x):
        return jnp.pad(x, ((0, 0), (0, hp - x.shape[-1])))

    w1s = pad_cols(w1[:state_dim]).astype(jnp.bfloat16)          # (state_dim, hp)
    w1a = pad_cols(w1[state_dim:]).astype(jnp.bfloat16)          # (action_dim, hp)
    b1p = pad_cols(b1).astype(jnp.float32)                       # (1, hp)
    w2p = jnp.pad(w2, ((0, hp - hidden), (0, hp - hidden))).astype(jnp.bfloat16)
    b2p = pad_cols(b2).astype(jnp.float32)                       # (1, hp)
    w3r = pad_cols(w3.T).astype(jnp.float32)                     # (1, hp) row
    b3s = b3.reshape((1,)).astype(jnp.float32)                   # scalar -> SMEM
    return (w1s, w1a, b1p, w2p, b2p, w3r, b3s)


# ---------------------------------------------------------------------------
# Forward pass
# ---------------------------------------------------------------------------
def critic_forward(state, action, kernel_params, *, tile_b=512):
    """Pallas equivalent of Critic.forward(state, action)."""
    w1s, w1a, b1, w2, b2, w3r, b3 = kernel_params
    B, state_dim = state.shape
    action_dim = action.shape[1]
    hp = w2.shape[0]

    # Batch tile: big enough to hit the HBM roofline, shrunk for tiny batches.
    tb = min(tile_b, _round_up(B, 8))
    pb = _round_up(B, tb)
    state = state.astype(jnp.float32)
    action = action.astype(jnp.float32)
    if pb != B:
        state = jnp.pad(state, ((0, pb - B), (0, 0)))
        action = jnp.pad(action, ((0, pb - B), (0, 0)))

    const = lambda i: (0, 0)   # weights/biases stay resident across the grid

    out = pl.pallas_call(
        critic_kernel,
        out_shape=jax.ShapeDtypeStruct((pb, 1), jnp.float32),
        grid=(pb // tb,),
        in_specs=[
            pl.BlockSpec((tb, state_dim), lambda i: (i, 0)),       # state tile
            pl.BlockSpec((tb, action_dim), lambda i: (i, 0)),      # action tile
            pl.BlockSpec((state_dim, hp), const),                  # W1_state
            pl.BlockSpec((action_dim, hp), const),                 # W1_action
            pl.BlockSpec((1, hp), const),                          # b1
            pl.BlockSpec((hp, hp), const),                         # W2
            pl.BlockSpec((1, hp), const),                          # b2
            pl.BlockSpec((1, hp), const),                          # w3 row
            pl.BlockSpec(memory_space=pltpu.MemorySpace.SMEM),     # b3 scalar
        ],
        out_specs=pl.BlockSpec((tb, 1), lambda i: (i, 0)),
        compiler_params=pltpu.CompilerParams(
            # batch axis is embarrassingly parallel -> v7x dual-TC sharding.
            dimension_semantics=("parallel",),
            # hidden=128 is tiny; default scoped VMEM is ample. If hidden is
            # ever scaled up, re-derive the tile/VMEM budget (v7x: 64 MiB) and
            # set vmem_limit_bytes here.
        ),
    )(state, action, w1s, w1a, b1, w2, b2, w3r, b3)
    return out[:B]


def critic_reference(state, action, params):
    """Pure-JAX f32 reference for correctness checking."""
    w1, b1, w2, b2, w3, b3 = params
    x = jnp.concatenate([state, action], axis=1)
    h1 = jnp.maximum(x @ w1 + b1, 0.0)
    h2 = jnp.maximum(h1 @ w2 + b2, 0.0)
    return h2 @ w3 + b3


if __name__ == "__main__":
    # Pendulum-v1: observation dim = 3, action dim = 1, hidden_size = 64.
    state_dim, action_dim, hidden_size = 3, 1, 64
    batch = 2

    key = jax.random.PRNGKey(0)
    k_params, k_state, k_action = jax.random.split(key, 3)

    params = init_critic_params(k_params, state_dim, action_dim, hidden_size)
    state = jax.random.normal(k_state, (batch, state_dim), jnp.float32)
    action = jax.random.normal(k_action, (batch, action_dim), jnp.float32)

    kernel_params = prepare_critic_params(params, state_dim)
    out = critic_forward(state, action, kernel_params)
    out = jax.block_until_ready(out)

    ref = critic_reference(state, action, params)
    assert out.shape == (batch, 1), out.shape
    # bf16 MXU operands (f32 accumulation) -> loosen tolerance vs pure-f32 ref.
    assert jnp.allclose(out, ref, atol=2e-2, rtol=2e-2), (out, ref)

    print("KERNEL_OK")
</pallas_src>

<mosaic_0001>
module attributes {stable_mosaic.version = 11 : i64} {
  func.func @critic_kernel(%arg0: i32, %arg1: memref<8x3xf32, #tpu.memory_space<vmem>>, %arg2: memref<8x1xf32, #tpu.memory_space<vmem>>, %arg3: memref<3x128xbf16, #tpu.memory_space<vmem>>, %arg4: memref<1x128xbf16, #tpu.memory_space<vmem>>, %arg5: memref<1x128xf32, #tpu.memory_space<vmem>>, %arg6: memref<128x128xbf16, #tpu.memory_space<vmem>>, %arg7: memref<1x128xf32, #tpu.memory_space<vmem>>, %arg8: memref<1x128xf32, #tpu.memory_space<vmem>>, %arg9: memref<1xf32, #tpu.memory_space<smem>>, %arg10: memref<8x1xf32, #tpu.memory_space<vmem>>) attributes {dimension_semantics = [#tpu.dimension_semantics<parallel>], iteration_bounds = array<i64: 1>, scalar_prefetch = 0 : i64, scratch_operands = 0 : i64, tpu.core_type = #tpu.core_type<tc>, window_params = [{transform_indices = @transform_0, window_bounds = array<i64: 8, 3>}, {transform_indices = @transform_1, window_bounds = array<i64: 8, 1>}, {pipeline_mode = #tpu.pipeline_mode<synchronous>, transform_indices = @transform_2, window_bounds = array<i64: 3, 128>}, {pipeline_mode = #tpu.pipeline_mode<synchronous>, transform_indices = @transform_3, window_bounds = array<i64: 1, 128>}, {pipeline_mode = #tpu.pipeline_mode<synchronous>, transform_indices = @transform_4, window_bounds = array<i64: 1, 128>}, {pipeline_mode = #tpu.pipeline_mode<synchronous>, transform_indices = @transform_5, window_bounds = array<i64: 128, 128>}, {pipeline_mode = #tpu.pipeline_mode<synchronous>, transform_indices = @transform_6, window_bounds = array<i64: 1, 128>}, {pipeline_mode = #tpu.pipeline_mode<synchronous>, transform_indices = @transform_7, window_bounds = array<i64: 1, 128>}, {transform_indices = @transform_8, window_bounds = array<i64: 1>}, {transform_indices = @transform_9, window_bounds = array<i64: 8, 1>}]} {
    %c0 = arith.constant 0 : index
    %c0_0 = arith.constant 0 : index
    %0 = vector.load %arg1[%c0, %c0_0] : memref<8x3xf32, #tpu.memory_space<vmem>>, vector<8x3xf32>
    %1 = arith.truncf %0 : vector<8x3xf32> to vector<8x3xbf16>
    %c0_1 = arith.constant 0 : index
    %c0_2 = arith.constant 0 : index
    %2 = vector.load %arg3[%c0_1, %c0_2] : memref<3x128xbf16, #tpu.memory_space<vmem>>, vector<3x128xbf16>
    %cst = arith.constant dense<0.000000e+00> : vector<8x128xf32>
    %3 = tpu.matmul %1, %2, %cst {dimension_numbers = #tpu.dot_dimension_numbers<[1], [0], [0], [1], [0, 0, 1, 1], [], []>} : vector<8x3xbf16>, vector<3x128xbf16>, vector<8x128xf32> -> vector<8x128xf32>
    %c0_3 = arith.constant 0 : index
    %c0_4 = arith.constant 0 : index
    %4 = vector.load %arg2[%c0_3, %c0_4] : memref<8x1xf32, #tpu.memory_space<vmem>>, vector<8x1xf32>
    %5 = arith.truncf %4 : vector<8x1xf32> to vector<8x1xbf16>
    %c0_5 = arith.constant 0 : index
    %c0_6 = arith.constant 0 : index
    %6 = vector.load %arg4[%c0_5, %c0_6] : memref<1x128xbf16, #tpu.memory_space<vmem>>, vector<1x128xbf16>
    %cst_7 = arith.constant dense<0.000000e+00> : vector<8x128xf32>
    %7 = tpu.matmul %5, %6, %cst_7 {dimension_numbers = #tpu.dot_dimension_numbers<[1], [0], [0], [1], [0, 0, 1, 1], [], []>} : vector<8x1xbf16>, vector<1x128xbf16>, vector<8x128xf32> -> vector<8x128xf32>
    %8 = arith.addf %3, %7 : vector<8x128xf32>
    %c0_8 = arith.constant 0 : index
    %c0_9 = arith.constant 0 : index
    %9 = vector.load %arg5[%c0_8, %c0_9] : memref<1x128xf32, #tpu.memory_space<vmem>>, vector<1x128xf32>
    %10 = vector.broadcast %9 : vector<1x128xf32> to vector<8x128xf32>
    %11 = arith.addf %8, %10 : vector<8x128xf32>
    %cst_10 = arith.constant 0.000000e+00 : f32
    %12 = vector.broadcast %cst_10 : f32 to vector<8x128xf32>
    %13 = arith.maximumf %11, %12 : vector<8x128xf32>
    %14 = arith.truncf %13 : vector<8x128xf32> to vector<8x128xbf16>
    %c0_11 = arith.constant 0 : index
    %c0_12 = arith.constant 0 : index
    %15 = vector.load %arg6[%c0_11, %c0_12] : memref<128x128xbf16, #tpu.memory_space<vmem>>, vector<128x128xbf16>
    %cst_13 = arith.constant dense<0.000000e+00> : vector<8x128xf32>
    %16 = tpu.matmul %14, %15, %cst_13 {dimension_numbers = #tpu.dot_dimension_numbers<[1], [0], [0], [1], [0, 0, 1, 1], [], []>} : vector<8x128xbf16>, vector<128x128xbf16>, vector<8x128xf32> -> vector<8x128xf32>
    %c0_14 = arith.constant 0 : index
    %c0_15 = arith.constant 0 : index
    %17 = vector.load %arg7[%c0_14, %c0_15] : memref<1x128xf32, #tpu.memory_space<vmem>>, vector<1x128xf32>
    %18 = vector.broadcast %17 : vector<1x128xf32> to vector<8x128xf32>
    %19 = arith.addf %16, %18 : vector<8x128xf32>
    %cst_16 = arith.constant 0.000000e+00 : f32
    %20 = vector.broadcast %cst_16 : f32 to vector<8x128xf32>
    %21 = arith.maximumf %19, %20 : vector<8x128xf32>
    %c0_17 = arith.constant 0 : index
    %c0_18 = arith.constant 0 : index
    %22 = vector.load %arg8[%c0_17, %c0_18] : memref<1x128xf32, #tpu.memory_space<vmem>>, vector<1x128xf32>
    %23 = vector.broadcast %22 : vector<1x128xf32> to vector<8x128xf32>
    %24 = arith.mulf %21, %23 : vector<8x128xf32>
    %cst_19 = arith.constant dense<0.000000e+00> : vector<8xf32>
    %25 = vector.multi_reduction <add>, %24, %cst_19 [1] : vector<8x128xf32> to vector<8xf32>
    %26 = vector.shape_cast %25 : vector<8xf32> to vector<8x1xf32>
    %c0_20 = arith.constant 0 : index
    %27 = memref.load %arg9[%c0_20] : memref<1xf32, #tpu.memory_space<smem>>
    %28 = vector.broadcast %27 : f32 to vector<8x1xf32>
    %29 = arith.addf %26, %28 : vector<8x1xf32>
    %c0_21 = arith.constant 0 : index
    %c0_22 = arith.constant 0 : index
    %30 = vector.load %arg10[%c0_21, %c0_22] : memref<8x1xf32, #tpu.memory_space<vmem>>, vector<8x1xf32>
    tpu.vector_store %arg10[%c0_21, %c0_22], %29 {strides = array<i32>} : memref<8x1xf32, #tpu.memory_space<vmem>>, vector<8x1xf32>,
    return
  }
  func.func @transform_0(%arg0: i32) -> (i32, i32) {
    %c0_i32 = arith.constant 0 : i32
    %c0_i32_0 = arith.constant 0 : i32
    return %arg0, %c0_i32 : i32, i32
  }
  func.func @transform_1(%arg0: i32) -> (i32, i32) {
    %c0_i32 = arith.constant 0 : i32
    %c0_i32_0 = arith.constant 0 : i32
    return %arg0, %c0_i32 : i32, i32
  }
  func.func @transform_2(%arg0: i32) -> (i32, i32) {
    %c0_i32 = arith.constant 0 : i32
    %c0_i32_0 = arith.constant 0 : i32
    %c0_i32_1 = arith.constant 0 : i32
    return %c0_i32, %c0_i32_0 : i32, i32
  }
  func.func @transform_3(%arg0: i32) -> (i32, i32) {
    %c0_i32 = arith.constant 0 : i32
    %c0_i32_0 = arith.constant 0 : i32
    %c0_i32_1 = arith.constant 0 : i32
    return %c0_i32, %c0_i32_0 : i32, i32
  }
  func.func @transform_4(%arg0: i32) -> (i32, i32) {
    %c0_i32 = arith.constant 0 : i32
    %c0_i32_0 = arith.constant 0 : i32
    %c0_i32_1 = arith.constant 0 : i32
    return %c0_i32, %c0_i32_0 : i32, i32
  }
  func.func @transform_5(%arg0: i32) -> (i32, i32) {
    %c0_i32 = arith.constant 0 : i32
    %c0_i32_0 = arith.constant 0 : i32
    %c0_i32_1 = arith.constant 0 : i32
    return %c0_i32, %c0_i32_0 : i32, i32
  }
  func.func @transform_6(%arg0: i32) -> (i32, i32) {
    %c0_i32 = arith.constant 0 : i32
    %c0_i32_0 = arith.constant 0 : i32
    %c0_i32_1 = arith.constant 0 : i32
    return %c0_i32, %c0_i32_0 : i32, i32
  }
  func.func @transform_7(%arg0: i32) -> (i32, i32) {
    %c0_i32 = arith.constant 0 : i32
    %c0_i32_0 = arith.constant 0 : i32
    %c0_i32_1 = arith.constant 0 : i32
    return %c0_i32, %c0_i32_0 : i32, i32
  }
  func.func @transform_8(%arg0: i32) -> i32 {
    %c0_i32 = arith.constant 0 : i32
    %c0_i32_0 = arith.constant 0 : i32
    return %c0_i32 : i32
  }
  func.func @transform_9(%arg0: i32) -> (i32, i32) {
    %c0_i32 = arith.constant 0 : i32
    %c0_i32_0 = arith.constant 0 : i32
    return %arg0, %c0_i32 : i32, i32
  }
}

</mosaic_0001>

<llo_original>
// kernel: tpu_custom_call.1
$region0: #{tpu_custom_call.1}
  #allocation0 [shape = 'u32[]', space=smem, size = 0x4, offset = 0x4, fixed_abs, tag = 'smem constant byte address 0x4 - core index']
  #allocation1 [shape = 'u32[144,128]{1,0:T(1,128)}', space=vmem, size = 0x12000, scoped, tag = 'internal scratch']
  #allocation2 [shape = 'f32[1]{0:T(128)S(6)}', space=smem, size = 0x200, scoped, tag = 'scoped memory for tpu_custom_call.1']
  %s0 = inlined_call_operand.vmem [shape: f32[8,3], index: 0, kind: input, shape index: {}]
  %s1 = inlined_call_operand.vmem [shape: f32[8,1], index: 1, kind: input, shape index: {}]
  %s2 = inlined_call_operand.vmem [shape: bf16[3,128], index: 2, kind: input, shape index: {}]
  %s3 = inlined_call_operand.vmem [shape: bf16[1,128], index: 3, kind: input, shape index: {}]
  %s4 = inlined_call_operand.vmem [shape: f32[1,128], index: 4, kind: input, shape index: {}]
  %s5 = inlined_call_operand.hbm [shape: bf16[128,128], index: 5, kind: input, shape index: {}]
  %s6 = inlined_call_operand.vmem [shape: f32[1,128], index: 6, kind: input, shape index: {}]
  %s7 = inlined_call_operand.vmem [shape: f32[1,128], index: 7, kind: input, shape index: {}]
  %s8 = inlined_call_operand.<no memory space> [shape: f32[1], index: 8, kind: input, shape index: {}]
  %s9 = inlined_call_operand.vmem [shape: f32[8,1], index: 9, kind: output, shape index: {}]
  %s10 = sld [smem:[#allocation0]]
  $region50: #{tpu_custom_call.1} parent=0
    _
  %s12 = ssub.s32 1, %s10
  %s13 = scalar_select 0, %s12, %s10
  %14 = sst [smem:[#allocation2]] %s8
  $region1: #{tpu_custom_call.1} parent=0
    #allocation3 [shape = 'u8[32768]{0}', space=vmem, size = 0x8000, scoped, tag = 'input window, operand 5, single buffered']
    #allocation4 [shape = 's32[1]{0}', space=sflag, size = 0x4, scoped, tag = 'scoped memory for tpu_custom_call.1']
    %15 = vsyncpa [#allocation4], 0
    // Predicated region
    $region2: #{tpu_custom_call.1} parent=1 // pred_check
      _
    $region3: #{tpu_custom_call.1} parent=1 // pred_check_branch
      %17 = sbr.rel (0) target = $region5
    $region4: #{tpu_custom_call.1} parent=1 // pred_region
      _
    $region5: #{tpu_custom_call.1} parent=1 // pred_fallthru
      _
    // Predicated region
    $region6: #{tpu_custom_call.1} parent=1 // pred_check
      _
    $region7: #{tpu_custom_call.1} parent=1 // pred_check_branch
      %19 = sbr.rel (0) target = $region9
    $region8: #{tpu_custom_call.1} parent=1 // pred_region
      _
    $region9: #{tpu_custom_call.1} parent=1 // pred_fallthru
      _
    // Predicated region
    $region10: #{tpu_custom_call.1} parent=1 // pred_check
      _
    $region11: #{tpu_custom_call.1} parent=1 // pred_check_branch
      %21 = sbr.rel (0) target = $region13
    $region12: #{tpu_custom_call.1} parent=1 // pred_region
      _
    $region13: #{tpu_custom_call.1} parent=1 // pred_fallthru
      _
    // Predicated region
    $region14: #{tpu_custom_call.1} parent=1 // pred_check
      _
    $region15: #{tpu_custom_call.1} parent=1 // pred_check_branch
      %23 = sbr.rel (0) target = $region17
    $region16: #{tpu_custom_call.1} parent=1 // pred_region
      _
    $region17: #{tpu_custom_call.1} parent=1 // pred_fallthru
      _
    // Predicated region
    $region18: #{tpu_custom_call.1} parent=1 // pred_check
      _
    $region19: #{tpu_custom_call.1} parent=1 // pred_check_branch
      %25 = sbr.rel (0) target = $region21
    $region20: #{tpu_custom_call.1} parent=1 // pred_region
      _
    $region21: #{tpu_custom_call.1} parent=1 // pred_fallthru
      _
    // Predicated region
    $region22: #{tpu_custom_call.1} parent=1 // pred_check
      _
    $region23: #{tpu_custom_call.1} parent=1 // pred_check_branch
      %27 = sbr.rel (0) target = $region25
    $region24: #{tpu_custom_call.1} parent=1 // pred_region
      %s29 = ssub.s32 1024, 1024
      %30 = vsyncadd [#allocation4], %s29
      %s31 = sshll.u32 [#allocation3], 4
      %s32 = int_to_ptr.vmem [resolvable:$true] %s31
      %37 = dma.hbm_to_vmem [thread:$0]  %s5, 1024, %s32, [#allocation4], 64, 64, 4
    $region25: #{tpu_custom_call.1} parent=1 // pred_fallthru
      _
    // Predicated region
    $region26: #{tpu_custom_call.1} parent=1 // pred_check
      _
    $region27: #{tpu_custom_call.1} parent=1 // pred_check_branch
      %39 = sbr.rel (0) target = $region29
    $region28: #{tpu_custom_call.1} parent=1 // pred_region
      _
    $region29: #{tpu_custom_call.1} parent=1 // pred_fallthru
      _
    // Predicated region
    $region30: #{tpu_custom_call.1} parent=1 // pred_check
      _
    $region31: #{tpu_custom_call.1} parent=1 // pred_check_branch
      %41 = sbr.rel (0) target = $region33
    $region32: #{tpu_custom_call.1} parent=1 // pred_region
      _
    $region33: #{tpu_custom_call.1} parent=1 // pred_fallthru
      _
    // Predicated region
    $region34: #{tpu_custom_call.1} parent=1 // pred_check
      _
    $region35: #{tpu_custom_call.1} parent=1 // pred_check_branch
      %43 = sbr.rel (0) target = $region37
    $region36: #{tpu_custom_call.1} parent=1 // pred_region
      _
    $region37: #{tpu_custom_call.1} parent=1 // pred_fallthru
      _
    // Predicated region
    $region38: #{tpu_custom_call.1} parent=1 // pred_check
      _
    $region39: #{tpu_custom_call.1} parent=1 // pred_check_branch
      %45 = sbr.rel (0) target = $region41
    $region40: #{tpu_custom_call.1} parent=1 // pred_region
      %46 = dma.done [#allocation4], 1024
    $region41: #{tpu_custom_call.1} parent=1 // pred_fallthru
      _
    %v48 = vld [vmem:[%s0] sm:$0xff]
    %v49 = vpack.c.bf16 %v48, %v48
    %v50 = vld [vmem:[%s2] sm:$0x3]
    %v51 = vld [vmem:[%s1] sm:$0xff]
    %v52 = vpack.c.bf16 %v51, %v51
    %v53 = vld [vmem:[%s3] sm:$0x1]
    %vm54 = vcmask 7168
    %v56 = vsel %vm54, %v52, 0
    %vm58 = vcmask 1040384
    %v59 = vsel 0, 4294967295, 65535
    %v60 = vsel %vm58, %v59, 0
    %v62 = vand.u32 %v53, %v60
    %64 = vmatprep.subr.bf16.mxu0 0
    %65 = vmatpush1.bf16.msra.mxu0 %v62
    %66 = vmatprep.subr.bf16.mxu0 0
    %67 = vmatpush1.bf16.msra.mxu0 0
    %68 = vmatprep.subr.bf16.mxu0 0
    %69 = vmatpush1.bf16.msra.mxu0 0
    %70 = vmatprep.subr.bf16.mxu0 0
    %71 = vmatpush1.bf16.msra.mxu0 0
    %72 = vmatprep.subr.bf16.mxu0 0
    %73 = vmatpush1.bf16.msra.mxu0 0
    %74 = vmatprep.subr.bf16.mxu0 0
    %75 = vmatpush1.bf16.msra.mxu0 0
    %76 = vmatprep.subr.bf16.mxu0 0
    %77 = vmatpush1.bf16.msra.mxu0 0
    %78 = vmatprep.subr.bf16.mxu0 0
    %79 = vmatpush1.bf16.msra.mxu0 0
    %80 = vmatprep.subr.bf16.mxu0 0
    %81 = vmatpush1.bf16.msra.mxu0 0
    %82 = vmatprep.subr.bf16.mxu0 0
    %83 = vmatpush1.bf16.msra.mxu0 0
    %84 = vmatprep.subr.bf16.mxu0 0
    %85 = vmatpush1.bf16.msra.mxu0 0
    %86 = vmatprep.subr.bf16.mxu0 0
    %87 = vmatpush1.bf16.msra.mxu0 0
    %88 = vmatprep.subr.bf16.mxu0 0
    %89 = vmatpush1.bf16.msra.mxu0 0
    %90 = vmatprep.subr.bf16.mxu0 0
    %91 = vmatpush1.bf16.msra.mxu0 0
    %92 = vmatprep.subr.bf16.mxu0 0
    %93 = vmatpush1.bf16.msra.mxu0 0
    %94 = vmatprep.subr.bf16.mxu0 0
    %95 = vmatpush1.bf16.msra.mxu0 0
    %96 = vmatprep.mubr.bf16.mxu0 0
    %97 = vmatmul.mubr.bf16.gmra.mrb[0].mxu0 %v56
    %v98 = vpop.f32.mrb[0].mxu0
    %v99 = vadd.f32 0.0, %v98
    %v100 = vpop.f32.mrb[0].mxu0
    %v101 = vpop.f32.mrb[0].mxu0
    %v102 = vpop.f32.mrb[0].mxu0
    %103 = vdwg.mxu0
    %vm104 = vcmask 23552
    %v106 = vsel %vm104, %v49, 0
    %vm108 = vcmask 1041408
    %v109 = vsel %vm58, 4294967295, 65535
    %v110 = vsel %vm108, %v109, 0
    %v112 = vand.u32 %v50, %v110
    %114 = vmatprep.subr.bf16.mxu0 0
    %115 = vmatpush1.bf16.msra.mxu0 %v112
    %116 = vmatprep.subr.bf16.mxu0 0
    %117 = vmatpush1.bf16.msra.mxu0 0
    %118 = vmatprep.subr.bf16.mxu0 0
    %119 = vmatpush1.bf16.msra.mxu0 0
    %120 = vmatprep.subr.bf16.mxu0 0
    %121 = vmatpush1.bf16.msra.mxu0 0
    %122 = vmatprep.subr.bf16.mxu0 0
    %123 = vmatpush1.bf16.msra.mxu0 0
    %124 = vmatprep.subr.bf16.mxu0 0
    %125 = vmatpush1.bf16.msra.mxu0 0
    %126 = vmatprep.subr.bf16.mxu0 0
    %127 = vmatpush1.bf16.msra.mxu0 0
    %128 = vmatprep.subr.bf16.mxu0 0
    %129 = vmatpush1.bf16.msra.mxu0 0
    %130 = vmatprep.subr.bf16.mxu0 0
    %131 = vmatpush1.bf16.msra.mxu0 0
    %132 = vmatprep.subr.bf16.mxu0 0
    %133 = vmatpush1.bf16.msra.mxu0 0
    %134 = vmatprep.subr.bf16.mxu0 0
    %135 = vmatpush1.bf16.msra.mxu0 0
    %136 = vmatprep.subr.bf16.mxu0 0
    %137 = vmatpush1.bf16.msra.mxu0 0
    %138 = vmatprep.subr.bf16.mxu0 0
    %139 = vmatpush1.bf16.msra.mxu0 0
    %140 = vmatprep.subr.bf16.mxu0 0
    %141 = vmatpush1.bf16.msra.mxu0 0
    %142 = vmatprep.subr.bf16.mxu0 0
    %143 = vmatpush1.bf16.msra.mxu0 0
    %144 = vmatprep.subr.bf16.mxu0 0
    %145 = vmatpush1.bf16.msra.mxu0 0
    %146 = vmatprep.mubr.bf16.mxu0 0
    %147 = vmatmul.mubr.bf16.gmra.mrb[0].mxu0 %v106
    %v148 = vpop.f32.mrb[0].mxu0
    %v149 = vadd.f32 %v99, %v148
    %v150 = vpop.f32.mrb[0].mxu0
    %v151 = vpop.f32.mrb[0].mxu0
    %v152 = vpop.f32.mrb[0].mxu0
    %153 = vdwg.mxu0
    %v154 = vld [vmem:[%s4] sm:$0x1]
    %v156 = vlaneseq
    %v157 = vshrl.u32 %v156, 7
    %v158 = vsub.s32 0, %v157
    %v159 = vrot.slane %v154, %v158
    %v161 = vadd.f32 %v149, %v159
    %v162 = vmax.f32 %v161, 0.0
    %v163 = vpack.c.bf16 %v162, %v162
    %v164 = vld [vmem:[#allocation3] sm:$0xf]
    %v165 = vld [vmem:[#allocation3 + $0x4] sm:$0xf]
    %v166 = vld [vmem:[#allocation3 + $0x8] sm:$0xf]
    %v167 = vld [vmem:[#allocation3 + $0xc] sm:$0xf]
    %v168 = vld [vmem:[#allocation3 + $0x10] sm:$0xf]
    %v169 = vld [vmem:[#allocation3 + $0x14] sm:$0xf]
    %v170 = vld [vmem:[#allocation3 + $0x18] sm:$0xf]
    %v171 = vld [vmem:[#allocation3 + $0x1c] sm:$0xf]
    %v172 = vld [vmem:[#allocation3 + $0x20] sm:$0xf]
    %v173 = vld [vmem:[#allocation3 + $0x24] sm:$0xf]
    %v174 = vld [vmem:[#allocation3 + $0x28] sm:$0xf]
    %v175 = vld [vmem:[#allocation3 + $0x2c] sm:$0xf]
    %v176 = vld [vmem:[#allocation3 + $0x30] sm:$0xf]
    %v177 = vld [vmem:[#allocation3 + $0x34] sm:$0xf]
    %v178 = vld [vmem:[#allocation3 + $0x38] sm:$0xf]
    %v179 = vld [vmem:[#allocation3 + $0x3c] sm:$0xf]
    %v180 = vld [vmem:[%s6] sm:$0x1]
    %v182 = vlaneseq
    %v183 = vshrl.u32 %v182, 7
    %v184 = vsub.s32 0, %v183
    %v185 = vrot.slane %v180, %v184
    %v203 = vunpack.c.l.b16 %v164
    %v204 = vunpack.c.l.b16 %v165
    %v205 = vunpack.c.l.b16 %v166
    %v206 = vunpack.c.l.b16 %v167
    %v207 = vunpack.c.l.b16 %v168
    %v208 = vunpack.c.l.b16 %v169
    %v209 = vunpack.c.l.b16 %v170
    %v210 = vunpack.c.l.b16 %v171
    %v211 = vunpack.c.l.b16 %v172
    %v212 = vunpack.c.l.b16 %v173
    %v213 = vunpack.c.l.b16 %v174
    %v214 = vunpack.c.l.b16 %v175
    %v215 = vunpack.c.l.b16 %v176
    %v216 = vunpack.c.l.b16 %v177
    %v217 = vunpack.c.l.b16 %v178
    %v218 = vunpack.c.l.b16 %v179
    %v219 = vpack.c.b16 %v204, %v203
    %v220 = vpack.c.b16 %v206, %v205
    %v221 = vpack.c.b16 %v208, %v207
    %v222 = vpack.c.b16 %v210, %v209
    %v223 = vpack.c.b16 %v212, %v211
    %v224 = vpack.c.b16 %v214, %v213
    %v225 = vpack.c.b16 %v216, %v215
    %v226 = vpack.c.b16 %v218, %v217
    %235 = vmatprep.subr.bf16.mxu0 0
    %236 = vmatpush1.bf16.msra.mxu0 %v219
    %237 = vmatprep.subr.bf16.mxu0 0
    %238 = vmatpush1.bf16.msra.mxu0 %v220
    %239 = vmatprep.subr.bf16.mxu0 0
    %240 = vmatpush1.bf16.msra.mxu0 %v221
    %241 = vmatprep.subr.bf16.mxu0 0
    %242 = vmatpush1.bf16.msra.mxu0 %v222
    %243 = vmatprep.subr.bf16.mxu0 0
    %244 = vmatpush1.bf16.msra.mxu0 %v223
    %245 = vmatprep.subr.bf16.mxu0 0
    %246 = vmatpush1.bf16.msra.mxu0 %v224
    %247 = vmatprep.subr.bf16.mxu0 0
    %248 = vmatpush1.bf16.msra.mxu0 %v225
    %249 = vmatprep.subr.bf16.mxu0 0
    %250 = vmatpush1.bf16.msra.mxu0 %v226
    %251 = vmatprep.subr.bf16.mxu0 0
    %252 = vmatpush1.bf16.msra.mxu0 0
    %253 = vmatprep.subr.bf16.mxu0 0
    %254 = vmatpush1.bf16.msra.mxu0 0
    %255 = vmatprep.subr.bf16.mxu0 0
    %256 = vmatpush1.bf16.msra.mxu0 0
    %257 = vmatprep.subr.bf16.mxu0 0
    %258 = vmatpush1.bf16.msra.mxu0 0
    %259 = vmatprep.subr.bf16.mxu0 0
    %260 = vmatpush1.bf16.msra.mxu0 0
    %261 = vmatprep.subr.bf16.mxu0 0
    %262 = vmatpush1.bf16.msra.mxu0 0
    %263 = vmatprep.subr.bf16.mxu0 0
    %264 = vmatpush1.bf16.msra.mxu0 0
    %265 = vmatprep.subr.bf16.mxu0 0
    %266 = vmatpush1.bf16.msra.mxu0 0
    %267 = vmatprep.mubr.bf16.mxu0 0
    %268 = vmatmul.mubr.bf16.gmra.mrb[0].mxu0 %v163
    %v269 = vpop.f32.mrb[0].mxu0
    %v270 = vadd.f32 %v185, %v269
    %v271 = vpop.f32.mrb[0].mxu0
    %v272 = vpop.f32.mrb[0].mxu0
    %v273 = vpop.f32.mrb[0].mxu0
    %274 = vdwg.mxu0
    %v275 = vmax.f32 %v270, 0.0
    %v276 = vld [vmem:[%s7] sm:$0x1]
    %v278 = vlaneseq
    %v279 = vshrl.u32 %v278, 7
    %v280 = vsub.s32 0, %v279
    %v281 = vrot.slane %v276, %v280
    %v283 = vmul.f32 %v275, %v281
    %284 = vadd.xlane.f32.xlu0 %v283
    %v285 = vpop.xlane.xlu0 %284
    %s286 = sld [smem:[#allocation2]]
    %v287 = vstv %s286
    %v288 = vadd.f32 %v285, %v287
    %289 = vst.msk [vmem:[%s9] sm:$0xff] %vm54, %v288
    // Predicated region
    $region42: #{tpu_custom_call.1} parent=1 // pred_check
      _
    $region43: #{tpu_custom_call.1} parent=1 // pred_check_branch
      %291 = sbr.rel (0) target = $region45
    $region44: #{tpu_custom_call.1} parent=1 // pred_region
      _
    $region45: #{tpu_custom_call.1} parent=1 // pred_fallthru
      _
    // Predicated region
    $region46: #{tpu_custom_call.1} parent=1 // pred_check
      _
    $region47: #{tpu_custom_call.1} parent=1 // pred_check_branch
      %293 = sbr.rel (0) target = $region49
    $region48: #{tpu_custom_call.1} parent=1 // pred_region
      _
    $region49: #{tpu_custom_call.1} parent=1 // pred_fallthru
      _
    %294 = vsyncpa [#allocation4], 1

</llo_original>
